<compile_context>
chip_gen: v6e
topology: v6e:2x2x1
jax: 0.10.0
libtpu: 0.0.40
codegen_flags: <defaults>
</compile_context>

<pallas_src>
import functools

import jax
import jax.numpy as jnp
from jax.experimental import pallas as pl
from jax.experimental.pallas import tpu as pltpu


def _round_up(x, m):
    return ((x + m - 1) // m) * m


def policy_kernel(x_ref, w1_ref, b1_ref, w2_ref, b2_ref, wh_ref, bh_ref,
                  out_ref, *, action_dim, matmul_dtype):
    """One batch tile: fused backbone + fused (mean|logstd|value) head."""
    x = x_ref[...]
    w1 = w1_ref[...]
    w2 = w2_ref[...]
    wh = wh_ref[...]

    if matmul_dtype != jnp.float32:
        # bf16 MXU operands; accumulation and all elementwise work stay in f32
        # (v5e VPU/EUP have no bf16 path).
        x = x.astype(matmul_dtype)
        w1 = w1.astype(matmul_dtype)
        w2 = w2.astype(matmul_dtype)
        wh = wh.astype(matmul_dtype)

    # Backbone: two Linear + ReLU layers, lane dims padded to 128.
    h1 = jnp.dot(x, w1, preferred_element_type=jnp.float32) + b1_ref[...]
    h1 = jnp.maximum(h1, 0.0)
    if matmul_dtype != jnp.float32:
        h1 = h1.astype(matmul_dtype)

    h2 = jnp.dot(h1, w2, preferred_element_type=jnp.float32) + b2_ref[...]
    h2 = jnp.maximum(h2, 0.0)
    if matmul_dtype != jnp.float32:
        h2 = h2.astype(matmul_dtype)

    # Fused heads: columns [0:A) = mean, [A:2A) = log_std, [2A] = value, rest = pad.
    heads = jnp.dot(h2, wh, preferred_element_type=jnp.float32) + bh_ref[...]

    # Apply clamp(-20, 2) only to the log_std lanes; keep one unmasked store.
    lane = jax.lax.broadcasted_iota(jnp.int32, heads.shape, dimension=1)
    is_logstd = (lane >= action_dim) & (lane < 2 * action_dim)
    out_ref[...] = jnp.where(is_logstd, jnp.clip(heads, -20.0, 2.0), heads)


def continuous_policy_forward(states, params, *, block_batch=256,
                              matmul_dtype=jnp.float32):
    """ContinuousPolicy forward pass as one Pallas kernel call.

    Returns (action_means [B,A], action_log_stds [B,A], state_values [B,1]).
    """
    states = jnp.asarray(states, jnp.float32)
    B, S = states.shape
    H1 = params["w1"].shape[1]
    H2 = params["w2"].shape[1]
    A = params["wm"].shape[1]

    # ---- pad / pack parameters once (zero padding => identical results) ----
    S_pad = _round_up(max(S, 8), 8)
    H1_pad = _round_up(H1, 128)
    H2_pad = _round_up(H2, 128)
    OUT = 2 * A + 1
    OUT_pad = _round_up(OUT, 128)

    w1 = jnp.zeros((S_pad, H1_pad), jnp.float32).at[:S, :H1].set(params["w1"])
    b1 = jnp.zeros((1, H1_pad), jnp.float32).at[:, :H1].set(params["b1"])
    w2 = jnp.zeros((H1_pad, H2_pad), jnp.float32).at[:H1, :H2].set(params["w2"])
    b2 = jnp.zeros((1, H2_pad), jnp.float32).at[:, :H2].set(params["b2"])

    wh = jnp.zeros((H2_pad, OUT_pad), jnp.float32)
    wh = wh.at[:H2, :A].set(params["wm"])
    wh = wh.at[:H2, A:2 * A].set(params["ws"])
    wh = wh.at[:H2, 2 * A:2 * A + 1].set(params["wv"])
    bh = jnp.zeros((1, OUT_pad), jnp.float32)
    bh = bh.at[:, :A].set(params["bm"])
    bh = bh.at[:, A:2 * A].set(params["bs"])
    bh = bh.at[:, 2 * A:2 * A + 1].set(params["bv"])

    # ---- batch tiling (rows); weights stay resident across grid steps ----
    TB = _round_up(min(block_batch, _round_up(B, 8)), 8)
    B_pad = _round_up(B, TB)
    x = jnp.zeros((B_pad, S_pad), jnp.float32).at[:B, :S].set(states)
    grid = (B_pad // TB,)

    # ---- compiler hints ----
    weight_bytes = 4 * (S_pad * H1_pad + H1_pad + H1_pad * H2_pad + H2_pad +
                        H2_pad * OUT_pad + OUT_pad)
    tile_bytes = 4 * TB * (S_pad + OUT_pad)          # one in tile + one out tile
    act_bytes = 4 * TB * (H1_pad + H2_pad)           # in-kernel intermediates
    vmem_limit = int(min(64 << 20,                   # v7x: stay within physical
                         max(16 << 20,
                             4 * tile_bytes + weight_bytes + 4 * act_bytes + (4 << 20))))

    flops = int(2 * B_pad * (S_pad * H1_pad + H1_pad * H2_pad + H2_pad * OUT_pad))
    bytes_accessed = int(4 * (B_pad * S_pad + B_pad * OUT_pad) + weight_bytes)

    kernel = functools.partial(policy_kernel, action_dim=A,
                               matmul_dtype=matmul_dtype)

    fused = pl.pallas_call(
        kernel,
        out_shape=jax.ShapeDtypeStruct((B_pad, OUT_pad), jnp.float32),
        grid_spec=pltpu.PrefetchScalarGridSpec(
            num_scalar_prefetch=0,
            grid=grid,
            in_specs=[
                pl.BlockSpec((TB, S_pad), lambda i: (i, 0)),        # states tile
                pl.BlockSpec((S_pad, H1_pad), lambda i: (0, 0)),    # w1 (resident)
                pl.BlockSpec((1, H1_pad), lambda i: (0, 0)),        # b1
                pl.BlockSpec((H1_pad, H2_pad), lambda i: (0, 0)),   # w2
                pl.BlockSpec((1, H2_pad), lambda i: (0, 0)),        # b2
                pl.BlockSpec((H2_pad, OUT_pad), lambda i: (0, 0)),  # fused head W
                pl.BlockSpec((1, OUT_pad), lambda i: (0, 0)),       # fused head b
            ],
            out_specs=pl.BlockSpec((TB, OUT_pad), lambda i: (i, 0)),
        ),
        compiler_params=pltpu.CompilerParams(
            dimension_semantics=("parallel",),
            vmem_limit_bytes=vmem_limit,
        ),
        cost_estimate=pl.CostEstimate(flops=flops, transcendentals=0,
                                      bytes_accessed=bytes_accessed),
    )(x, w1, b1, w2, b2, wh, bh)

    # Lane-dense kernel output; split heads outside the kernel.
    action_means = fused[:B, :A]
    action_log_stds = fused[:B, A:2 * A]
    state_values = fused[:B, 2 * A:2 * A + 1]
    return action_means, action_log_stds, state_values


def init_params(key, state_dim, action_dim, hidden_dims=(64, 64)):
    """Deterministic parameter init mirroring the PyTorch module's shapes/init scheme."""
    dims = [state_dim] + list(hidden_dims)
    keys = jax.random.split(key, 8)
    ki = iter(keys)

    def linear(k, fan_in, fan_out, bound=None):
        if bound is None:
            bound = 1.0 / jnp.sqrt(fan_in)  # PyTorch default Linear init range
        kw, kb = jax.random.split(k)
        w = jax.random.uniform(kw, (fan_in, fan_out), jnp.float32, -bound, bound)
        b = jax.random.uniform(kb, (1, fan_out), jnp.float32, -bound, bound)
        return w, b

    w1, b1 = linear(next(ki), dims[0], dims[1])
    w2, b2 = linear(next(ki), dims[1], dims[2])
    # mean_head: uniform_(-0.003, 0.003) for both weight and bias
    wm, bm = linear(next(ki), dims[2], action_dim, bound=0.003)
    ws, bs = linear(next(ki), dims[2], action_dim)
    wv, bv = linear(next(ki), dims[2], 1)

    return {"w1": w1, "b1": b1, "w2": w2, "b2": b2,
            "wm": wm, "bm": bm, "ws": ws, "bs": bs,
            "wv": wv, "bv": bv}


def reference_forward(states, p):
    """Pure-JAX reference for correctness checking."""
    h1 = jnp.maximum(states @ p["w1"] + p["b1"], 0.0)
    h2 = jnp.maximum(h1 @ p["w2"] + p["b2"], 0.0)
    mean = h2 @ p["wm"] + p["bm"]
    logstd = jnp.clip(h2 @ p["ws"] + p["bs"], -20.0, 2.0)
    value = h2 @ p["wv"] + p["bv"]
    return mean, logstd, value


if __name__ == "__main__":
    key = jax.random.PRNGKey(0)
    k_params, k_states = jax.random.split(key)

    batch = 2
    state_dim = 16
    action_dim = 4
    hidden_dims = (64, 64)

    params = init_params(k_params, state_dim, action_dim, hidden_dims)
    states = jax.random.normal(k_states, (batch, state_dim), dtype=jnp.float32)

    # f32 matmul path: bit-faithful to the reference.
    means, log_stds, values = continuous_policy_forward(states, params)
    jax.block_until_ready((means, log_stds, values))

    ref_means, ref_log_stds, ref_values = reference_forward(states, params)
    assert means.shape == (batch, action_dim)
    assert log_stds.shape == (batch, action_dim)
    assert values.shape == (batch, 1)
    assert jnp.allclose(means, ref_means, atol=1e-5)
    assert jnp.allclose(log_stds, ref_log_stds, atol=1e-5)
    assert jnp.allclose(values, ref_values, atol=1e-5)

    # bf16 MXU-operand path (v6e/v5e throughput option): loose tolerance.
    means_bf, log_stds_bf, values_bf = continuous_policy_forward(
        states, params, matmul_dtype=jnp.bfloat16)
    jax.block_until_ready((means_bf, log_stds_bf, values_bf))
    assert jnp.allclose(means_bf, ref_means, atol=0.15, rtol=0.15)
    assert jnp.allclose(log_stds_bf, ref_log_stds, atol=0.15, rtol=0.15)
    assert jnp.allclose(values_bf, ref_values, atol=0.15, rtol=0.15)

    print("KERNEL_OK")
</pallas_src>

<mosaic_0001>
module attributes {stable_mosaic.version = 11 : i64} {
  func.func @policy_kernel(%arg0: i32, %arg1: memref<8x16xf32, #tpu.memory_space<vmem>>, %arg2: memref<16x128xf32, #tpu.memory_space<vmem>>, %arg3: memref<1x128xf32, #tpu.memory_space<vmem>>, %arg4: memref<128x128xf32, #tpu.memory_space<vmem>>, %arg5: memref<1x128xf32, #tpu.memory_space<vmem>>, %arg6: memref<128x128xf32, #tpu.memory_space<vmem>>, %arg7: memref<1x128xf32, #tpu.memory_space<vmem>>, %arg8: memref<8x128xf32, #tpu.memory_space<vmem>>) attributes {dimension_semantics = [#tpu.dimension_semantics<parallel>], iteration_bounds = array<i64: 1>, scalar_prefetch = 0 : i64, scratch_operands = 0 : i64, tpu.core_type = #tpu.core_type<tc>, window_params = [{transform_indices = @transform_0, window_bounds = array<i64: 8, 16>}, {pipeline_mode = #tpu.pipeline_mode<synchronous>, transform_indices = @transform_1, window_bounds = array<i64: 16, 128>}, {pipeline_mode = #tpu.pipeline_mode<synchronous>, transform_indices = @transform_2, window_bounds = array<i64: 1, 128>}, {pipeline_mode = #tpu.pipeline_mode<synchronous>, transform_indices = @transform_3, window_bounds = array<i64: 128, 128>}, {pipeline_mode = #tpu.pipeline_mode<synchronous>, transform_indices = @transform_4, window_bounds = array<i64: 1, 128>}, {pipeline_mode = #tpu.pipeline_mode<synchronous>, transform_indices = @transform_5, window_bounds = array<i64: 128, 128>}, {pipeline_mode = #tpu.pipeline_mode<synchronous>, transform_indices = @transform_6, window_bounds = array<i64: 1, 128>}, {transform_indices = @transform_7, window_bounds = array<i64: 8, 128>}]} {
    %c0 = arith.constant 0 : index
    %c0_0 = arith.constant 0 : index
    %0 = vector.load %arg1[%c0, %c0_0] : memref<8x16xf32, #tpu.memory_space<vmem>>, vector<8x16xf32>
    %c0_1 = arith.constant 0 : index
    %c0_2 = arith.constant 0 : index
    %1 = vector.load %arg2[%c0_1, %c0_2] : memref<16x128xf32, #tpu.memory_space<vmem>>, vector<16x128xf32>
    %c0_3 = arith.constant 0 : index
    %c0_4 = arith.constant 0 : index
    %2 = vector.load %arg4[%c0_3, %c0_4] : memref<128x128xf32, #tpu.memory_space<vmem>>, vector<128x128xf32>
    %c0_5 = arith.constant 0 : index
    %c0_6 = arith.constant 0 : index
    %3 = vector.load %arg6[%c0_5, %c0_6] : memref<128x128xf32, #tpu.memory_space<vmem>>, vector<128x128xf32>
    %cst = arith.constant dense<0.000000e+00> : vector<8x128xf32>
    %4 = tpu.matmul %0, %1, %cst {dimension_numbers = #tpu.dot_dimension_numbers<[1], [0], [0], [1], [0, 0, 1, 1], [], []>} : vector<8x16xf32>, vector<16x128xf32>, vector<8x128xf32> -> vector<8x128xf32>
    %c0_7 = arith.constant 0 : index
    %c0_8 = arith.constant 0 : index
    %5 = vector.load %arg3[%c0_7, %c0_8] : memref<1x128xf32, #tpu.memory_space<vmem>>, vector<1x128xf32>
    %6 = vector.broadcast %5 : vector<1x128xf32> to vector<8x128xf32>
    %7 = arith.addf %4, %6 : vector<8x128xf32>
    %cst_9 = arith.constant 0.000000e+00 : f32
    %8 = vector.broadcast %cst_9 : f32 to vector<8x128xf32>
    %9 = arith.maximumf %7, %8 : vector<8x128xf32>
    %cst_10 = arith.constant dense<0.000000e+00> : vector<8x128xf32>
    %10 = tpu.matmul %9, %2, %cst_10 {dimension_numbers = #tpu.dot_dimension_numbers<[1], [0], [0], [1], [0, 0, 1, 1], [], []>} : vector<8x128xf32>, vector<128x128xf32>, vector<8x128xf32> -> vector<8x128xf32>
    %c0_11 = arith.constant 0 : index
    %c0_12 = arith.constant 0 : index
    %11 = vector.load %arg5[%c0_11, %c0_12] : memref<1x128xf32, #tpu.memory_space<vmem>>, vector<1x128xf32>
    %12 = vector.broadcast %11 : vector<1x128xf32> to vector<8x128xf32>
    %13 = arith.addf %10, %12 : vector<8x128xf32>
    %cst_13 = arith.constant 0.000000e+00 : f32
    %14 = vector.broadcast %cst_13 : f32 to vector<8x128xf32>
    %15 = arith.maximumf %13, %14 : vector<8x128xf32>
    %cst_14 = arith.constant dense<0.000000e+00> : vector<8x128xf32>
    %16 = tpu.matmul %15, %3, %cst_14 {dimension_numbers = #tpu.dot_dimension_numbers<[1], [0], [0], [1], [0, 0, 1, 1], [], []>} : vector<8x128xf32>, vector<128x128xf32>, vector<8x128xf32> -> vector<8x128xf32>
    %c0_15 = arith.constant 0 : index
    %c0_16 = arith.constant 0 : index
    %17 = vector.load %arg7[%c0_15, %c0_16] : memref<1x128xf32, #tpu.memory_space<vmem>>, vector<1x128xf32>
    %18 = vector.broadcast %17 : vector<1x128xf32> to vector<8x128xf32>
    %19 = arith.addf %16, %18 : vector<8x128xf32>
    %20 = tpu.iota {dimensions = array<i32: 1>} : vector<8x128xi32>
    %c4_i32 = arith.constant 4 : i32
    %21 = vector.broadcast %c4_i32 : i32 to vector<8x128xi32>
    %22 = arith.cmpi sge, %20, %21 : vector<8x128xi32>
    %c8_i32 = arith.constant 8 : i32
    %23 = vector.broadcast %c8_i32 : i32 to vector<8x128xi32>
    %24 = arith.cmpi slt, %20, %23 : vector<8x128xi32>
    %25 = arith.andi %22, %24 : vector<8x128xi1>
    %cst_17 = arith.constant -2.000000e+01 : f32
    %cst_18 = arith.constant 2.000000e+00 : f32
    %26 = vector.broadcast %cst_17 : f32 to vector<8x128xf32>
    %27 = arith.maximumf %26, %19 : vector<8x128xf32>
    %28 = vector.broadcast %cst_18 : f32 to vector<8x128xf32>
    %29 = arith.minimumf %28, %27 : vector<8x128xf32>
    %30 = arith.select %25, %29, %19 : vector<8x128xi1>, vector<8x128xf32>
    %c0_19 = arith.constant 0 : index
    %c0_20 = arith.constant 0 : index
    %31 = vector.load %arg8[%c0_19, %c0_20] : memref<8x128xf32, #tpu.memory_space<vmem>>, vector<8x128xf32>
    tpu.vector_store %arg8[%c0_19, %c0_20], %30 {strides = array<i32>} : memref<8x128xf32, #tpu.memory_space<vmem>>, vector<8x128xf32>,
    return
  }
  func.func @transform_0(%arg0: i32) -> (i32, i32) {
    %c0_i32 = arith.constant 0 : i32
    %c0_i32_0 = arith.constant 0 : i32
    return %arg0, %c0_i32 : i32, i32
  }
  func.func @transform_1(%arg0: i32) -> (i32, i32) {
    %c0_i32 = arith.constant 0 : i32
    %c0_i32_0 = arith.constant 0 : i32
    %c0_i32_1 = arith.constant 0 : i32
    return %c0_i32, %c0_i32_0 : i32, i32
  }
  func.func @transform_2(%arg0: i32) -> (i32, i32) {
    %c0_i32 = arith.constant 0 : i32
    %c0_i32_0 = arith.constant 0 : i32
    %c0_i32_1 = arith.constant 0 : i32
    return %c0_i32, %c0_i32_0 : i32, i32
  }
  func.func @transform_3(%arg0: i32) -> (i32, i32) {
    %c0_i32 = arith.constant 0 : i32
    %c0_i32_0 = arith.constant 0 : i32
    %c0_i32_1 = arith.constant 0 : i32
    return %c0_i32, %c0_i32_0 : i32, i32
  }
  func.func @transform_4(%arg0: i32) -> (i32, i32) {
    %c0_i32 = arith.constant 0 : i32
    %c0_i32_0 = arith.constant 0 : i32
    %c0_i32_1 = arith.constant 0 : i32
    return %c0_i32, %c0_i32_0 : i32, i32
  }
  func.func @transform_5(%arg0: i32) -> (i32, i32) {
    %c0_i32 = arith.constant 0 : i32
    %c0_i32_0 = arith.constant 0 : i32
    %c0_i32_1 = arith.constant 0 : i32
    return %c0_i32, %c0_i32_0 : i32, i32
  }
  func.func @transform_6(%arg0: i32) -> (i32, i32) {
    %c0_i32 = arith.constant 0 : i32
    %c0_i32_0 = arith.constant 0 : i32
    %c0_i32_1 = arith.constant 0 : i32
    return %c0_i32, %c0_i32_0 : i32, i32
  }
  func.func @transform_7(%arg0: i32) -> (i32, i32) {
    %c0_i32 = arith.constant 0 : i32
    %c0_i32_0 = arith.constant 0 : i32
    return %arg0, %c0_i32 : i32, i32
  }
}

</mosaic_0001>

<llo_original>
// kernel: tpu_custom_call.1
$region0: #{tpu_custom_call.1}
  #allocation0 [shape = 'u32[]', space=smem, size = 0x4, offset = 0x4, fixed_abs, tag = 'smem constant byte address 0x4 - core index']
  #allocation1 [shape = 'u32[144,128]{1,0:T(1,128)}', space=vmem, size = 0x12000, scoped, tag = 'internal scratch']
  %s0 = inlined_call_operand.hbm [shape: f32[8,16], index: 0, kind: input, shape index: {}]
  %s1 = inlined_call_operand.hbm [shape: f32[16,128], index: 1, kind: input, shape index: {}]
  %s2 = inlined_call_operand.vmem [shape: f32[1,128], index: 2, kind: input, shape index: {}]
  %s3 = inlined_call_operand.hbm [shape: f32[128,128], index: 3, kind: input, shape index: {}]
  %s4 = inlined_call_operand.vmem [shape: f32[1,128], index: 4, kind: input, shape index: {}]
  %s5 = inlined_call_operand.hbm [shape: f32[128,128], index: 5, kind: input, shape index: {}]
  %s6 = inlined_call_operand.vmem [shape: f32[1,128], index: 6, kind: input, shape index: {}]
  %s7 = inlined_call_operand.hbm [shape: f32[8,128], index: 7, kind: output, shape index: {}]
  %s8 = sld [smem:[#allocation0]]
  $region54: #{tpu_custom_call.1} parent=0
    _
  %s10 = ssub.s32 1, %s8
  %s11 = scalar_select 0, %s10, %s8
  $region1: #{tpu_custom_call.1} parent=0
    #allocation2 [shape = 'u8[4096]{0}', space=vmem, size = 0x1000, scoped, tag = 'input window, operand 0, single buffered']
    #allocation3 [shape = 's32[1]{0}', space=sflag, size = 0x4, scoped, tag = 'scoped memory for tpu_custom_call.1']
    #allocation4 [shape = 's32[1]{0}', space=sflag, size = 0x4, scoped, tag = 'scoped memory for tpu_custom_call.1']
    #allocation5 [shape = 'u8[8192]{0}', space=vmem, size = 0x2000, scoped, tag = 'input window, operand 1, single buffered']
    #allocation6 [shape = 's32[1]{0}', space=sflag, size = 0x4, scoped, tag = 'scoped memory for tpu_custom_call.1']
    #allocation7 [shape = 'u8[65536]{0}', space=vmem, size = 0x10000, scoped, tag = 'input window, operand 3, single buffered']
    #allocation8 [shape = 'u8[65536]{0}', space=vmem, size = 0x10000, scoped, tag = 'input window, operand 5, single buffered']
    #allocation9 [shape = 's32[1]{0}', space=sflag, size = 0x4, scoped, tag = 'scoped memory for tpu_custom_call.1']
    #allocation10 [shape = 'u8[4096]{0}', space=vmem, size = 0x1000, scoped, tag = 'output window, operand 0, single buffered']
    %12 = vsyncpa [#allocation3], 0
    %13 = vsyncpa [#allocation6], 0
    %14 = vsyncpa [#allocation9], 0
    %15 = vsyncpa [#allocation4], 0
    // Predicated region
    $region2: #{tpu_custom_call.1} parent=1 // pred_check
      _
    $region3: #{tpu_custom_call.1} parent=1 // pred_check_branch
      %17 = sbr.rel (0) target = $region5
    $region4: #{tpu_custom_call.1} parent=1 // pred_region
      %s19 = ssub.s32 128, 128
      %20 = vsyncadd [#allocation3], %s19
      %s22 = sshll.u32 [#allocation2], 4
      %s23 = int_to_ptr.vmem [resolvable:$true] %s22
      %25 = dma.hbm_to_vmem [thread:$0]  %s0, 128, %s23, [#allocation3]
    $region5: #{tpu_custom_call.1} parent=1 // pred_fallthru
      _
    // Predicated region
    $region6: #{tpu_custom_call.1} parent=1 // pred_check
      _
    $region7: #{tpu_custom_call.1} parent=1 // pred_check_branch
      %27 = sbr.rel (0) target = $region9
    $region8: #{tpu_custom_call.1} parent=1 // pred_region
      %s29 = ssub.s32 256, 256
      %30 = vsyncadd [#allocation6], %s29
      %s31 = sshll.u32 [#allocation5], 4
      %s32 = int_to_ptr.vmem [resolvable:$true] %s31
      %37 = dma.hbm_to_vmem [thread:$0]  %s1, 256, %s32, [#allocation6], 128, 128, 8
    $region9: #{tpu_custom_call.1} parent=1 // pred_fallthru
      _
    // Predicated region
    $region10: #{tpu_custom_call.1} parent=1 // pred_check
      _
    $region11: #{tpu_custom_call.1} parent=1 // pred_check_branch
      %39 = sbr.rel (0) target = $region13
    $region12: #{tpu_custom_call.1} parent=1 // pred_region
      _
    $region13: #{tpu_custom_call.1} parent=1 // pred_fallthru
      _
    // Predicated region
    $region14: #{tpu_custom_call.1} parent=1 // pred_check
      _
    $region15: #{tpu_custom_call.1} parent=1 // pred_check_branch
      %41 = sbr.rel (0) target = $region17
    $region16: #{tpu_custom_call.1} parent=1 // pred_region
      %s43 = ssub.s32 2048, 2048
      %44 = vsyncadd [#allocation6], %s43
      %s45 = sshll.u32 [#allocation7], 4
      %s46 = int_to_ptr.vmem [resolvable:$true] %s45
      %51 = dma.hbm_to_vmem [thread:$0]  %s3, 2048, %s46, [#allocation6], 128, 128, 8
    $region17: #{tpu_custom_call.1} parent=1 // pred_fallthru
      _
    // Predicated region
    $region18: #{tpu_custom_call.1} parent=1 // pred_check
      _
    $region19: #{tpu_custom_call.1} parent=1 // pred_check_branch
      %53 = sbr.rel (0) target = $region21
    $region20: #{tpu_custom_call.1} parent=1 // pred_region
      _
    $region21: #{tpu_custom_call.1} parent=1 // pred_fallthru
      _
    // Predicated region
    $region22: #{tpu_custom_call.1} parent=1 // pred_check
      _
    $region23: #{tpu_custom_call.1} parent=1 // pred_check_branch
      %55 = sbr.rel (0) target = $region25
    $region24: #{tpu_custom_call.1} parent=1 // pred_region
      %s57 = ssub.s32 2048, 2048
      %58 = vsyncadd [#allocation9], %s57
      %s59 = sshll.u32 [#allocation8], 4
      %s60 = int_to_ptr.vmem [resolvable:$true] %s59
      %65 = dma.hbm_to_vmem [thread:$0]  %s5, 2048, %s60, [#allocation9], 128, 128, 8
    $region25: #{tpu_custom_call.1} parent=1 // pred_fallthru
      _
    // Predicated region
    $region26: #{tpu_custom_call.1} parent=1 // pred_check
      _
    $region27: #{tpu_custom_call.1} parent=1 // pred_check_branch
      %67 = sbr.rel (0) target = $region29
    $region28: #{tpu_custom_call.1} parent=1 // pred_region
      _
    $region29: #{tpu_custom_call.1} parent=1 // pred_fallthru
      _
    // Predicated region
    $region30: #{tpu_custom_call.1} parent=1 // pred_check
      _
    $region31: #{tpu_custom_call.1} parent=1 // pred_check_branch
      %69 = sbr.rel (0) target = $region33
    $region32: #{tpu_custom_call.1} parent=1 // pred_region
      %70 = dma.done [#allocation3], 128
    $region33: #{tpu_custom_call.1} parent=1 // pred_fallthru
      _
    // Predicated region
    $region34: #{tpu_custom_call.1} parent=1 // pred_check
      _
    $region35: #{tpu_custom_call.1} parent=1 // pred_check_branch
      %72 = sbr.rel (0) target = $region37
    $region36: #{tpu_custom_call.1} parent=1 // pred_region
      %73 = dma.done [#allocation6], 256
    $region37: #{tpu_custom_call.1} parent=1 // pred_fallthru
      _
    // Predicated region
    $region38: #{tpu_custom_call.1} parent=1 // pred_check
      _
    $region39: #{tpu_custom_call.1} parent=1 // pred_check_branch
      %75 = sbr.rel (0) target = $region41
    $region40: #{tpu_custom_call.1} parent=1 // pred_region
      %76 = dma.done [#allocation6], 2048
    $region41: #{tpu_custom_call.1} parent=1 // pred_fallthru
      _
    // Predicated region
    $region42: #{tpu_custom_call.1} parent=1 // pred_check
      _
    $region43: #{tpu_custom_call.1} parent=1 // pred_check_branch
      %78 = sbr.rel (0) target = $region45
    $region44: #{tpu_custom_call.1} parent=1 // pred_region
      %79 = dma.done [#allocation9], 2048
    $region45: #{tpu_custom_call.1} parent=1 // pred_fallthru
      _
    %v80 = vld [vmem:[#allocation2] sm:$0xff]
    %v81 = vld [vmem:[#allocation5] sm:$0xff]
    %v82 = vld [vmem:[#allocation5 + $0x8] sm:$0xff]
    %v83 = vld [vmem:[#allocation7] sm:$0xff]
    %v84 = vld [vmem:[#allocation7 + $0x8] sm:$0xff]
    %v85 = vld [vmem:[#allocation7 + $0x10] sm:$0xff]
    %v86 = vld [vmem:[#allocation7 + $0x18] sm:$0xff]
    %v87 = vld [vmem:[#allocation7 + $0x20] sm:$0xff]
    %v88 = vld [vmem:[#allocation7 + $0x28] sm:$0xff]
    %v89 = vld [vmem:[#allocation7 + $0x30] sm:$0xff]
    %v90 = vld [vmem:[#allocation7 + $0x38] sm:$0xff]
    %v91 = vld [vmem:[#allocation7 + $0x40] sm:$0xff]
    %v92 = vld [vmem:[#allocation7 + $0x48] sm:$0xff]
    %v93 = vld [vmem:[#allocation7 + $0x50] sm:$0xff]
    %v94 = vld [vmem:[#allocation7 + $0x58] sm:$0xff]
    %v95 = vld [vmem:[#allocation7 + $0x60] sm:$0xff]
    %v96 = vld [vmem:[#allocation7 + $0x68] sm:$0xff]
    %v97 = vld [vmem:[#allocation7 + $0x70] sm:$0xff]
    %v98 = vld [vmem:[#allocation7 + $0x78] sm:$0xff]
    %v99 = vld [vmem:[#allocation8] sm:$0xff]
    %v100 = vld [vmem:[#allocation8 + $0x8] sm:$0xff]
    %v101 = vld [vmem:[#allocation8 + $0x10] sm:$0xff]
    %v102 = vld [vmem:[#allocation8 + $0x18] sm:$0xff]
    %v103 = vld [vmem:[#allocation8 + $0x20] sm:$0xff]
    %v104 = vld [vmem:[#allocation8 + $0x28] sm:$0xff]
    %v105 = vld [vmem:[#allocation8 + $0x30] sm:$0xff]
    %v106 = vld [vmem:[#allocation8 + $0x38] sm:$0xff]
    %v107 = vld [vmem:[#allocation8 + $0x40] sm:$0xff]
    %v108 = vld [vmem:[#allocation8 + $0x48] sm:$0xff]
    %v109 = vld [vmem:[#allocation8 + $0x50] sm:$0xff]
    %v110 = vld [vmem:[#allocation8 + $0x58] sm:$0xff]
    %v111 = vld [vmem:[#allocation8 + $0x60] sm:$0xff]
    %v112 = vld [vmem:[#allocation8 + $0x68] sm:$0xff]
    %v113 = vld [vmem:[#allocation8 + $0x70] sm:$0xff]
    %v114 = vld [vmem:[#allocation8 + $0x78] sm:$0xff]
    %v115 = vld [vmem:[%s2] sm:$0x1]
    %v117 = vlaneseq
    %v118 = vshrl.u32 %v117, 7
    %v119 = vsub.s32 0, %v118
    %v120 = vrot.slane %v115, %v119
    %vm122 = vcmask 130048
    %v124 = vsel %vm122, %v80, 0
    %126 = vmatprep.subr.mxu0 0.0
    %127 = vmatpush1.msra.mxu0 0.0
    %128 = vmatprep.subr.mxu0 0.0
    %129 = vmatpush1.msra.mxu0 0.0
    %130 = vmatprep.subr.mxu0 0.0
    %131 = vmatpush1.msra.mxu0 0.0
    %132 = vmatprep.subr.mxu0 0.0
    %133 = vmatpush1.msra.mxu0 0.0
    %134 = vmatprep.subr.mxu0 0.0
    %135 = vmatpush1.msra.mxu0 0.0
    %136 = vmatprep.subr.mxu0 0.0
    %137 = vmatpush1.msra.mxu0 0.0
    %138 = vmatprep.subr.mxu0 0.0
    %139 = vmatpush1.msra.mxu0 0.0
    %140 = vmatprep.subr.mxu0 0.0
    %141 = vmatpush1.msra.mxu0 0.0
    %142 = vmatprep.subr.mxu0 0.0
    %143 = vmatpush1.msra.mxu0 0.0
    %144 = vmatprep.subr.mxu0 0.0
    %145 = vmatpush1.msra.mxu0 0.0
    %146 = vmatprep.subr.mxu0 0.0
    %147 = vmatpush1.msra.mxu0 0.0
    %148 = vmatprep.subr.mxu0 0.0
    %149 = vmatpush1.msra.mxu0 0.0
    %150 = vmatprep.subr.mxu0 0.0
    %151 = vmatpush1.msra.mxu0 0.0
    %152 = vmatprep.subr.mxu0 0.0
    %153 = vmatpush1.msra.mxu0 0.0
    %154 = vmatprep.subr.mxu0 0.0
    %155 = vmatpush1.msra.mxu0 %v82
    %156 = vmatprep.subr.mxu0 0.0
    %157 = vmatpush1.msra.mxu0 %v81
    %158 = vmatprep.subr.mxu0 0.0
    %159 = vmatpush2.msra.mxu0 0.0
    %160 = vmatprep.subr.mxu0 0.0
    %161 = vmatpush2.msra.mxu0 0.0
    %162 = vmatprep.subr.mxu0 0.0
    %163 = vmatpush2.msra.mxu0 0.0
    %164 = vmatprep.subr.mxu0 0.0
    %165 = vmatpush2.msra.mxu0 0.0
    %166 = vmatprep.subr.mxu0 0.0
    %167 = vmatpush2.msra.mxu0 0.0
    %168 = vmatprep.subr.mxu0 0.0
    %169 = vmatpush2.msra.mxu0 0.0
    %170 = vmatprep.subr.mxu0 0.0
    %171 = vmatpush2.msra.mxu0 0.0
    %172 = vmatprep.subr.mxu0 0.0
    %173 = vmatpush2.msra.mxu0 0.0
    %174 = vmatprep.subr.mxu0 0.0
    %175 = vmatpush2.msra.mxu0 0.0
    %176 = vmatprep.subr.mxu0 0.0
    %177 = vmatpush2.msra.mxu0 0.0
    %178 = vmatprep.subr.mxu0 0.0
    %179 = vmatpush2.msra.mxu0 0.0
    %180 = vmatprep.subr.mxu0 0.0
    %181 = vmatpush2.msra.mxu0 0.0
    %182 = vmatprep.subr.mxu0 0.0
    %183 = vmatpush2.msra.mxu0 0.0
    %184 = vmatprep.subr.mxu0 0.0
    %185 = vmatpush2.msra.mxu0 0.0
    %186 = vmatprep.subr.mxu0 0.0
    %187 = vmatpush2.msra.mxu0 0.0
    %188 = vmatprep.subr.mxu0 0.0
    %189 = vmatpush2.msra.mxu0 0.0
    %190 = vmatprep.mubr.f32.mxu0 0.0
    %191 = vmatmul.mubr.f32.gmra.mxu0 %v124
    %v192 = vpop.f32.mrf.mxu0
    %v193 = vadd.f32 %v120, %v192
    %v194 = vpop.f32.mrf.mxu0
    %195 = vdwg.mxu0
    %v196 = vmax.f32 %v193, 0.0
    %v197 = vld [vmem:[%s4] sm:$0x1]
    %v199 = vlaneseq
    %v200 = vshrl.u32 %v199, 7
    %v201 = vsub.s32 0, %v200
    %v202 = vrot.slane %v197, %v201
    %204 = vmatprep.subr.mxu0 0.0
    %205 = vmatpush1.msra.mxu0 %v98
    %206 = vmatprep.subr.mxu0 0.0
    %207 = vmatpush1.msra.mxu0 %v97
    %208 = vmatprep.subr.mxu0 0.0
    %209 = vmatpush1.msra.mxu0 %v96
    %210 = vmatprep.subr.mxu0 0.0
    %211 = vmatpush1.msra.mxu0 %v95
    %212 = vmatprep.subr.mxu0 0.0
    %213 = vmatpush1.msra.mxu0 %v94
    %214 = vmatprep.subr.mxu0 0.0
    %215 = vmatpush1.msra.mxu0 %v93
    %216 = vmatprep.subr.mxu0 0.0
    %217 = vmatpush1.msra.mxu0 %v92
    %218 = vmatprep.subr.mxu0 0.0
    %219 = vmatpush1.msra.mxu0 %v91
    %220 = vmatprep.subr.mxu0 0.0
    %221 = vmatpush1.msra.mxu0 %v90
    %222 = vmatprep.subr.mxu0 0.0
    %223 = vmatpush1.msra.mxu0 %v89
    %224 = vmatprep.subr.mxu0 0.0
    %225 = vmatpush1.msra.mxu0 %v88
    %226 = vmatprep.subr.mxu0 0.0
    %227 = vmatpush1.msra.mxu0 %v87
    %228 = vmatprep.subr.mxu0 0.0
    %229 = vmatpush1.msra.mxu0 %v86
    %230 = vmatprep.subr.mxu0 0.0
    %231 = vmatpush1.msra.mxu0 %v85
    %232 = vmatprep.subr.mxu0 0.0
    %233 = vmatpush1.msra.mxu0 %v84
    %234 = vmatprep.subr.mxu0 0.0
    %235 = vmatpush1.msra.mxu0 %v83
    %236 = vmatprep.subr.mxu0 0.0
    %237 = vmatpush2.msra.mxu0 0.0
    %238 = vmatprep.subr.mxu0 0.0
    %239 = vmatpush2.msra.mxu0 0.0
    %240 = vmatprep.subr.mxu0 0.0
    %241 = vmatpush2.msra.mxu0 0.0
    %242 = vmatprep.subr.mxu0 0.0
    %243 = vmatpush2.msra.mxu0 0.0
    %244 = vmatprep.subr.mxu0 0.0
    %245 = vmatpush2.msra.mxu0 0.0
    %246 = vmatprep.subr.mxu0 0.0
    %247 = vmatpush2.msra.mxu0 0.0
    %248 = vmatprep.subr.mxu0 0.0
    %249 = vmatpush2.msra.mxu0 0.0
    %250 = vmatprep.subr.mxu0 0.0
    %251 = vmatpush2.msra.mxu0 0.0
    %252 = vmatprep.subr.mxu0 0.0
    %253 = vmatpush2.msra.mxu0 0.0
    %254 = vmatprep.subr.mxu0 0.0
    %255 = vmatpush2.msra.mxu0 0.0
    %256 = vmatprep.subr.mxu0 0.0
    %257 = vmatpush2.msra.mxu0 0.0
    %258 = vmatprep.subr.mxu0 0.0
    %259 = vmatpush2.msra.mxu0 0.0
    %260 = vmatprep.subr.mxu0 0.0
    %261 = vmatpush2.msra.mxu0 0.0
    %262 = vmatprep.subr.mxu0 0.0
    %263 = vmatpush2.msra.mxu0 0.0
    %264 = vmatprep.subr.mxu0 0.0
    %265 = vmatpush2.msra.mxu0 0.0
    %266 = vmatprep.subr.mxu0 0.0
    %267 = vmatpush2.msra.mxu0 0.0
    %268 = vmatprep.mubr.f32.mxu0 0.0
    %269 = vmatmul.mubr.f32.gmra.mxu0 %v196
    %v270 = vpop.f32.mrf.mxu0
    %v271 = vadd.f32 %v202, %v270
    %v272 = vpop.f32.mrf.mxu0
    %273 = vdwg.mxu0
    %v274 = vmax.f32 %v271, 0.0
    %v275 = vld [vmem:[%s6] sm:$0x1]
    %v277 = vlaneseq
    %v278 = vshrl.u32 %v277, 7
    %v279 = vsub.s32 0, %v278
    %v280 = vrot.slane %v275, %v279
    %282 = vmatprep.subr.mxu0 0.0
    %283 = vmatpush1.msra.mxu0 %v114
    %284 = vmatprep.subr.mxu0 0.0
    %285 = vmatpush1.msra.mxu0 %v113
    %286 = vmatprep.subr.mxu0 0.0
    %287 = vmatpush1.msra.mxu0 %v112
    %288 = vmatprep.subr.mxu0 0.0
    %289 = vmatpush1.msra.mxu0 %v111
    %290 = vmatprep.subr.mxu0 0.0
    %291 = vmatpush1.msra.mxu0 %v110
    %292 = vmatprep.subr.mxu0 0.0
    %293 = vmatpush1.msra.mxu0 %v109
    %294 = vmatprep.subr.mxu0 0.0
    %295 = vmatpush1.msra.mxu0 %v108
    %296 = vmatprep.subr.mxu0 0.0
    %297 = vmatpush1.msra.mxu0 %v107
    %298 = vmatprep.subr.mxu0 0.0
    %299 = vmatpush1.msra.mxu0 %v106
    %300 = vmatprep.subr.mxu0 0.0
    %301 = vmatpush1.msra.mxu0 %v105
    %302 = vmatprep.subr.mxu0 0.0
    %303 = vmatpush1.msra.mxu0 %v104
    %304 = vmatprep.subr.mxu0 0.0
    %305 = vmatpush1.msra.mxu0 %v103
    %306 = vmatprep.subr.mxu0 0.0
    %307 = vmatpush1.msra.mxu0 %v102
    %308 = vmatprep.subr.mxu0 0.0
    %309 = vmatpush1.msra.mxu0 %v101
    %310 = vmatprep.subr.mxu0 0.0
    %311 = vmatpush1.msra.mxu0 %v100
    %312 = vmatprep.subr.mxu0 0.0
    %313 = vmatpush1.msra.mxu0 %v99
    %314 = vmatprep.subr.mxu0 0.0
    %315 = vmatpush2.msra.mxu0 0.0
    %316 = vmatprep.subr.mxu0 0.0
    %317 = vmatpush2.msra.mxu0 0.0
    %318 = vmatprep.subr.mxu0 0.0
    %319 = vmatpush2.msra.mxu0 0.0
    %320 = vmatprep.subr.mxu0 0.0
    %321 = vmatpush2.msra.mxu0 0.0
    %322 = vmatprep.subr.mxu0 0.0
    %323 = vmatpush2.msra.mxu0 0.0
    %324 = vmatprep.subr.mxu0 0.0
    %325 = vmatpush2.msra.mxu0 0.0
    %326 = vmatprep.subr.mxu0 0.0
    %327 = vmatpush2.msra.mxu0 0.0
    %328 = vmatprep.subr.mxu0 0.0
    %329 = vmatpush2.msra.mxu0 0.0
    %330 = vmatprep.subr.mxu0 0.0
    %331 = vmatpush2.msra.mxu0 0.0
    %332 = vmatprep.subr.mxu0 0.0
    %333 = vmatpush2.msra.mxu0 0.0
    %334 = vmatprep.subr.mxu0 0.0
    %335 = vmatpush2.msra.mxu0 0.0
    %336 = vmatprep.subr.mxu0 0.0
    %337 = vmatpush2.msra.mxu0 0.0
    %338 = vmatprep.subr.mxu0 0.0
    %339 = vmatpush2.msra.mxu0 0.0
    %340 = vmatprep.subr.mxu0 0.0
    %341 = vmatpush2.msra.mxu0 0.0
    %342 = vmatprep.subr.mxu0 0.0
    %343 = vmatpush2.msra.mxu0 0.0
    %344 = vmatprep.subr.mxu0 0.0
    %345 = vmatpush2.msra.mxu0 0.0
    %346 = vmatprep.mubr.f32.mxu0 0.0
    %347 = vmatmul.mubr.f32.gmra.mxu0 %v274
    %v348 = vpop.f32.mrf.mxu0
    %v349 = vadd.f32 %v280, %v348
    %v350 = vpop.f32.mrf.mxu0
    %351 = vdwg.mxu0
    %v352 = vlaneseq
    %v353 = vand.u32 %v352, 127
    %vm354 = vcmp.ge.s32.totalorder %v353, 4
    %vm355 = vcmp.lt.s32.totalorder %v353, 8
    %vm356 = vmand %vm354, %vm355
    %v357 = vmax.f32 %v349, -20.0
    %v358 = vmin.f32 %v357, 2.0
    %v359 = vsel %vm356, %v358, %v349
    %360 = vst [vmem:[#allocation10] sm:$0xff] %v359
    // Predicated region
    $region46: #{tpu_custom_call.1} parent=1 // pred_check
      _
    $region47: #{tpu_custom_call.1} parent=1 // pred_check_branch
      %362 = sbr.rel (0) target = $region49
    $region48: #{tpu_custom_call.1} parent=1 // pred_region
      %s364 = ssub.s32 128, 128
      %365 = vsyncadd [#allocation4], %s364
      %s367 = sshll.u32 [#allocation10], 4
      %s368 = int_to_ptr.vmem [resolvable:$true] %s367
      %370 = dma.vmem_to_hbm [thread:$0]  %s368, 128, %s7, [#allocation4]
    $region49: #{tpu_custom_call.1} parent=1 // pred_fallthru
      _
    // Predicated region
    $region50: #{tpu_custom_call.1} parent=1 // pred_check
      _
    $region51: #{tpu_custom_call.1} parent=1 // pred_check_branch
      %372 = sbr.rel (0) target = $region53
    $region52: #{tpu_custom_call.1} parent=1 // pred_region
      %373 = dma.done [#allocation4], 128
    $region53: #{tpu_custom_call.1} parent=1 // pred_fallthru
      _
    %374 = vsyncpa [#allocation3], 1
    %375 = vsyncpa [#allocation6], 1
    %376 = vsyncpa [#allocation9], 1
    %377 = vsyncpa [#allocation4], 1

</llo_original>
